<compile_context>
chip_gen: v7x
topology: tpu7x:2x2x1
jax: 0.10.0
libtpu: 0.0.40
codegen_flags: <defaults>
</compile_context>

<pallas_src>
import functools

import jax
import jax.numpy as jnp
from jax.experimental import pallas as pl
from jax.experimental.pallas import tpu as pltpu

GEM_EPS = 1e-6  # GEM['eps'] default (deterministic, in-script)

_LANE = 128
_SUBLANE = 8
_TARGET_TILE_BYTES = 4 << 20    # per-tile DMA target (2-8 MiB sweet spot)
_VMEM_LIMIT_BYTES = 32 << 20    # 4 double-buffered 4 MiB tiles + f32 temps fit comfortably


def _round_up(x, m):
    return (x + m - 1) // m * m


def _cdiv(a, b):
    return (a + b - 1) // b


# ---------------------------------------------------------------------------
# Kernels
# ---------------------------------------------------------------------------

def _l2n_nchw_kernel(x_ref, o_ref, *, eps):
    """Block: (b_tile, C, hw_tile).  Normalize over the channel axis (axis=1)."""
    x = x_ref[...]
    x32 = x.astype(jnp.float32)
    sumsq = jnp.sum(x32 * x32, axis=1, keepdims=True)          # (b_tile, 1, hw_tile) f32
    inv = pl.reciprocal(jnp.sqrt(sumsq) + eps, approx=False)   # exact reciprocal
    # Final scale in the input dtype (inv computed in f32): smaller f32 working set.
    o_ref[...] = x * inv.astype(x.dtype)


def _l2n_vec_kernel(x_ref, o_ref, *, eps):
    """Block: (b_tile, C) lane-dense fast path for HW == 1.  Normalize over lanes."""
    x = x_ref[...]
    x32 = x.astype(jnp.float32)
    sumsq = jnp.sum(x32 * x32, axis=-1, keepdims=True)          # (b_tile, 1) f32
    inv = pl.reciprocal(jnp.sqrt(sumsq) + eps, approx=False)
    o_ref[...] = x * inv.astype(x.dtype)


# ---------------------------------------------------------------------------
# Wrappers
# ---------------------------------------------------------------------------

def _l2n_vec(x2d, eps, B, C, itemsize):
    row_bytes = max(1, C * itemsize)
    max_rows = max(_SUBLANE, (_TARGET_TILE_BYTES // row_bytes) // _SUBLANE * _SUBLANE)
    b_tile = B if B <= max_rows else max_rows          # full-extent or multiple of 8
    nb = _cdiv(B, b_tile)
    # Give megacore something to shard when one tile would cover everything.
    if nb == 1 and B >= 2 * _SUBLANE:
        b_tile = _round_up(_cdiv(B, 2), _SUBLANE)
        nb = _cdiv(B, b_tile)

    cost = pl.CostEstimate(flops=3 * B * C, transcendentals=2 * B,
                           bytes_accessed=2 * B * C * itemsize)
    return pl.pallas_call(
        functools.partial(_l2n_vec_kernel, eps=eps),
        out_shape=jax.ShapeDtypeStruct((B, C), x2d.dtype),
        grid=(nb,),
        in_specs=[pl.BlockSpec((b_tile, C), lambda b: (b, 0))],
        out_specs=pl.BlockSpec((b_tile, C), lambda b: (b, 0)),
        compiler_params=pltpu.CompilerParams(
            dimension_semantics=("parallel",),
            vmem_limit_bytes=_VMEM_LIMIT_BYTES),
        cost_estimate=cost,
    )(x2d)


def _l2n_nchw(x3d, eps, B, C, HW, itemsize):
    col_bytes = max(1, C * itemsize)
    max_lanes = max(_LANE, (_TARGET_TILE_BYTES // col_bytes) // _LANE * _LANE)

    if _round_up(HW, _LANE) <= max_lanes:
        # Whole spatial extent fits in one tile: a full-extent last dim is legal
        # for any HW (no 128-multiple requirement), so fold a batch tile in to
        # reach the byte target instead of padding the lanes.
        hw_tile = HW
        slab_bytes = max(1, C * HW * itemsize)
        b_tile = max(1, min(B, _TARGET_TILE_BYTES // slab_bytes))
    else:
        hw_tile = max_lanes        # multiple of 128 -> ragged last tile is masked
        b_tile = 1

    nb, ns = _cdiv(B, b_tile), _cdiv(HW, hw_tile)
    # Guarantee >= 2 grid steps so megacore (v7x) can shard the work.
    if nb * ns == 1:
        if B >= 2:
            b_tile = _cdiv(B, 2)
            nb = _cdiv(B, b_tile)
        elif HW >= 2 * _LANE:
            hw_tile = _round_up(_cdiv(HW, 2), _LANE)
            ns = _cdiv(HW, hw_tile)

    cost = pl.CostEstimate(flops=3 * B * C * HW, transcendentals=2 * B * HW,
                           bytes_accessed=2 * B * C * HW * itemsize)
    return pl.pallas_call(
        functools.partial(_l2n_nchw_kernel, eps=eps),
        out_shape=jax.ShapeDtypeStruct((B, C, HW), x3d.dtype),
        grid=(nb, ns),
        in_specs=[pl.BlockSpec((b_tile, C, hw_tile), lambda b, s: (b, 0, s))],
        out_specs=pl.BlockSpec((b_tile, C, hw_tile), lambda b, s: (b, 0, s)),
        compiler_params=pltpu.CompilerParams(
            dimension_semantics=("parallel", "parallel"),
            vmem_limit_bytes=_VMEM_LIMIT_BYTES),
        cost_estimate=cost,
    )(x3d)


def l2n(x, eps=GEM_EPS):
    """L2-normalize `x` over dim=1 (PyTorch L2N semantics).  Accepts any ndim >= 2."""
    assert x.ndim >= 2, "L2N expects at least (B, C)"
    orig_shape = x.shape
    B, C = orig_shape[0], orig_shape[1]
    HW = 1
    for d in orig_shape[2:]:
        HW *= d
    itemsize = jnp.dtype(x.dtype).itemsize

    if HW == 1:
        out = _l2n_vec(x.reshape(B, C), eps, B, C, itemsize)
    else:
        out = _l2n_nchw(x.reshape(B, C, HW), eps, B, C, HW, itemsize)
    return out.reshape(orig_shape)


# ---------------------------------------------------------------------------
# Self-test
# ---------------------------------------------------------------------------

def _ref_l2n(x, eps=GEM_EPS):
    x32 = x.astype(jnp.float32)
    n = jnp.sqrt(jnp.sum(x32 * x32, axis=1, keepdims=True))
    return x32 / (n + eps)


if __name__ == "__main__":
    key = jax.random.PRNGKey(0)
    k1, k2, k3, k4, k5 = jax.random.split(key, 5)

    # (B, C, H, W) feature map -- the module's primary input layout.
    x = jax.random.normal(k1, (2, 4, 16, 16), dtype=jnp.float32)
    y = jax.block_until_ready(l2n(x))
    assert y.shape == x.shape and y.dtype == x.dtype
    assert jnp.allclose(y, _ref_l2n(x), atol=1e-6, rtol=1e-6)

    # Spatial size not a multiple of 128 (full-extent last dim, no padding).
    x2 = jax.random.normal(k2, (2, 8, 7, 7), dtype=jnp.float32)
    y2 = jax.block_until_ready(l2n(x2))
    assert jnp.allclose(y2, _ref_l2n(x2), atol=1e-6, rtol=1e-6)

    # Multi-tile ragged spatial path (last spatial tile is partially masked).
    x3 = jax.random.normal(k3, (1, 4, 40, 40), dtype=jnp.float32)
    y3 = jax.block_until_ready(l2n(x3))
    assert jnp.allclose(y3, _ref_l2n(x3), atol=1e-6, rtol=1e-6)

    # HW == 1 global-descriptor fast path (B, C, 1, 1).
    x4 = jax.random.normal(k4, (2, 32, 1, 1), dtype=jnp.float32)
    y4 = jax.block_until_ready(l2n(x4))
    assert jnp.allclose(y4, _ref_l2n(x4), atol=1e-6, rtol=1e-6)

    # bf16 input: sum-of-squares in f32, final scale in bf16 (looser test tolerance).
    x5 = jax.random.normal(k5, (2, 16, 8, 8), dtype=jnp.bfloat16)
    y5 = jax.block_until_ready(l2n(x5))
    assert y5.shape == x5.shape and y5.dtype == jnp.bfloat16
    assert jnp.allclose(y5.astype(jnp.float32), _ref_l2n(x5), atol=2e-2, rtol=2e-2)

    print("KERNEL_OK")
</pallas_src>

<mosaic_0001>
module attributes {stable_mosaic.version = 11 : i64} {
  func.func @_l2n_nchw_kernel(%arg0: i32, %arg1: i32, %arg2: memref<1x4x256xf32, #tpu.memory_space<vmem>>, %arg3: memref<1x4x256xf32, #tpu.memory_space<vmem>>) attributes {dimension_semantics = [#tpu.dimension_semantics<parallel>, #tpu.dimension_semantics<parallel>], iteration_bounds = array<i64: 2, 1>, scalar_prefetch = 0 : i64, scratch_operands = 0 : i64, tpu.core_type = #tpu.core_type<tc>, window_params = [{transform_indices = @transform_0, window_bounds = array<i64: 1, 4, 256>}, {transform_indices = @transform_1, window_bounds = array<i64: 1, 4, 256>}]} {
    %c0 = arith.constant 0 : index
    %c0_0 = arith.constant 0 : index
    %c0_1 = arith.constant 0 : index
    %0 = vector.load %arg2[%c0, %c0_0, %c0_1] : memref<1x4x256xf32, #tpu.memory_space<vmem>>, vector<1x4x256xf32>
    %1 = arith.mulf %0, %0 : vector<1x4x256xf32>
    %cst = arith.constant dense<0.000000e+00> : vector<1x256xf32>
    %2 = vector.multi_reduction <add>, %1, %cst [1] : vector<1x4x256xf32> to vector<1x256xf32>
    %3 = vector.shape_cast %2 : vector<1x256xf32> to vector<1x1x256xf32>
    %4 = math.sqrt %3 : vector<1x1x256xf32>
    %cst_2 = arith.constant 9.99999997E-7 : f32
    %5 = vector.broadcast %cst_2 : f32 to vector<1x1x256xf32>
    %6 = arith.addf %4, %5 : vector<1x1x256xf32>
    %7 = tpu.reciprocal %6 : vector<1x1x256xf32> -> vector<1x1x256xf32>
    %8 = vector.broadcast %7 : vector<1x1x256xf32> to vector<1x4x256xf32>
    %9 = arith.mulf %0, %8 : vector<1x4x256xf32>
    %c0_3 = arith.constant 0 : index
    %c0_4 = arith.constant 0 : index
    %c0_5 = arith.constant 0 : index
    %10 = vector.load %arg3[%c0_3, %c0_4, %c0_5] : memref<1x4x256xf32, #tpu.memory_space<vmem>>, vector<1x4x256xf32>
    tpu.vector_store %arg3[%c0_3, %c0_4, %c0_5], %9 {strides = array<i32>} : memref<1x4x256xf32, #tpu.memory_space<vmem>>, vector<1x4x256xf32>,
    return
  }
  func.func @transform_0(%arg0: i32, %arg1: i32) -> (i32, i32, i32) {
    %c0_i32 = arith.constant 0 : i32
    %c0_i32_0 = arith.constant 0 : i32
    return %arg0, %c0_i32, %arg1 : i32, i32, i32
  }
  func.func @transform_1(%arg0: i32, %arg1: i32) -> (i32, i32, i32) {
    %c0_i32 = arith.constant 0 : i32
    %c0_i32_0 = arith.constant 0 : i32
    return %arg0, %c0_i32, %arg1 : i32, i32, i32
  }
}

</mosaic_0001>

<llo_original>
// kernel: tpu_custom_call.1
$region0: #{tpu_custom_call.1}
  #allocation0 [shape = 'u32[]', space=smem, size = 0x4, offset = 0x4, fixed_abs, tag = 'smem constant byte address 0x4 - core index']
  #allocation1 [shape = 'u32[144,128]{1,0:T(1,128)}', space=vmem, size = 0x12000, scoped, tag = 'internal scratch']
  %s0 = inlined_call_operand.hbm [shape: f32[2,4,256], index: 0, kind: input, shape index: {}]
  %s1 = inlined_call_operand.hbm [shape: f32[2,4,256], index: 1, kind: output, shape index: {}]
  %s2 = sld [smem:[#allocation0]]
  $region41: #{tpu_custom_call.1} parent=0
    _
  %s4 = ssub.s32 1, %s2
  %s5 = scalar_select 0, %s4, %s2
  $region1: #{tpu_custom_call.1} parent=0
    #allocation2 [shape = 'u8[8192]{0}', space=vmem, size = 0x2000, scoped, tag = 'input window, operand 0']
    #allocation3 [shape = 's32[2]{0}', space=sflag, size = 0x8, scoped, tag = 'scoped memory for tpu_custom_call.1']
    #allocation4 [shape = 's32[2]{0}', space=sflag, size = 0x8, scoped, tag = 'scoped memory for tpu_custom_call.1']
    #allocation5 [shape = 'u8[8192]{0}', space=vmem, size = 0x2000, scoped, tag = 'output window, operand 0']
    %6 = vsyncpa [#allocation3], 0
    %s7 = scalar_lea.sflag [#allocation3], 1
    %8 = vsyncpa %s7, 0
    %9 = vsyncpa [#allocation4], 0
    %s10 = scalar_lea.sflag [#allocation4], 1
    %11 = vsyncpa %s10, 0
    loop: start=0, step=1, limit=4
    $region2: #{tpu_custom_call.1} parent=1 // loop_pre_header
      _
    $region3: #{tpu_custom_call.1} parent=1 // loop_header
      %s13 = sphi 0, %s17
      %p14 = scmp.ge.s32.totalorder %s13, 4
      %s20 = sphi 0, %s32
      %s21 = sphi 0, %s28
      %s22 = sphi 0, %s20
      %s23 = sphi 0, %s21
      %s24 = sphi 0, %s22
      %s25 = sphi 0, %s23
      %s37 = sphi 0, %s39
      %s40 = sphi 0, %s37
      %s41 = sphi 0, %s40
      %s57 = sphi 0, %s41
      %s65 = sphi 0, %s67
      %s68 = sphi 0, %s65
      %s69 = sphi 0, %s68
      %s85 = sphi 0, %s69
    $region4: #{tpu_custom_call.1} parent=1 // loop_header_branch
      %16 = sbr.rel (%p14) target = $region8
    $region5: #{tpu_custom_call.1} parent=1 // loop_body
      %s18 = ssub.s32 %s13, 1
      %s19 = ssub.s32 %s13, 2
      %s26 = sadd.s32 1, %s21
      %p27 = scmp.ge.s32.totalorder %s26, 1
      %s28 = scalar_select %p27, 0, %s26
      %s29 = sadd.s32 1, %s20
      %s30 = scalar_select %p27, %s29, %s20
      %p31 = scmp.ge.s32.totalorder %s30, 2
      %s32 = scalar_select %p31, 0, %s30
      %s33 = ssub.s32 %s20, %s32
      %s34 = ssub.s32 %s21, %s28
      %s35 = sor.u32 %s33, %s34
      %p36 = scmp.eq.s32.totalorder %s35, 0
      %s38 = sadd.s32 %s37, 1
      %s39 = scalar_select %p36, %s37, %s38
      %p42 = pneg %p36
      %p43 = scmp.eq.s32.totalorder %s13, 1
      %p44 = por %p42, %p43
      %p45 = scmp.ne.s32.totalorder %s37, %s40
      %p46 = scmp.eq.s32.totalorder %s13, 0
      %p47 = por %p45, %p46
      %p48 = scmp.ne.s32.totalorder %s37, %s40
      %p49 = scmp.eq.s32.totalorder %s18, 1
      %p50 = por %p48, %p49
      %p51 = scmp.ne.s32.totalorder %s40, %s41
      %p52 = scmp.eq.s32.totalorder %s18, 0
      %p53 = por %p51, %p52
      %p54 = scmp.ne.s32.totalorder %s40, %s41
      %p55 = scmp.eq.s32.totalorder %s19, 1
      %p56 = por %p54, %p55
      %p58 = scmp.ne.s32.totalorder %s41, %s57
      %p59 = scmp.eq.s32.totalorder %s19, 0
      %p60 = por %p58, %p59
      %s61 = ssub.s32 %s20, %s32
      %s62 = ssub.s32 %s21, %s28
      %s63 = sor.u32 %s61, %s62
      %p64 = scmp.eq.s32.totalorder %s63, 0
      %s66 = sadd.s32 %s65, 1
      %s67 = scalar_select %p64, %s65, %s66
      %p70 = pneg %p64
      %p71 = scmp.eq.s32.totalorder %s13, 1
      %p72 = por %p70, %p71
      %p73 = scmp.ne.s32.totalorder %s65, %s68
      %p74 = scmp.eq.s32.totalorder %s13, 0
      %p75 = por %p73, %p74
      %p76 = scmp.ne.s32.totalorder %s65, %s68
      %p77 = scmp.eq.s32.totalorder %s18, 1
      %p78 = por %p76, %p77
      %p79 = scmp.ne.s32.totalorder %s68, %s69
      %p80 = scmp.eq.s32.totalorder %s18, 0
      %p81 = por %p79, %p80
      %p82 = scmp.ne.s32.totalorder %s68, %s69
      %p83 = scmp.eq.s32.totalorder %s19, 1
      %p84 = por %p82, %p83
      %p86 = scmp.ne.s32.totalorder %s69, %s85
      %p87 = scmp.eq.s32.totalorder %s19, 0
      %p88 = por %p86, %p87
      %p89 = scmp.le.s32.totalorder 1, %s13
      %p90 = scmp.lt.s32.totalorder %s13, 3
      %p91 = pnand %p89, %p90
      %p92 = pneg %p91
      // Predicated region
      $region9: #{tpu_custom_call.1} parent=5 // pred_check
        _
      $region10: #{tpu_custom_call.1} parent=5 // pred_check_branch
        %94 = sbr.rel (%p91) target = $region12
      $region11: #{tpu_custom_call.1} parent=5 // pred_region
        %s95 = ssub.s32 %s13, 1
      $region12: #{tpu_custom_call.1} parent=5 // pred_fallthru
        _
      %p96 = scmp.lt.s32.totalorder %s13, 2
      // Predicated region
      $region13: #{tpu_custom_call.1} parent=5 // pred_check
        %p97 = pneg %p96
      $region14: #{tpu_custom_call.1} parent=5 // pred_check_branch
        %99 = sbr.rel (%p97) target = $region16
      $region15: #{tpu_custom_call.1} parent=5 // pred_region
        // Predicated region
        $region17: #{tpu_custom_call.1} parent=15 // pred_check
          %p100 = pneg %p47
        $region18: #{tpu_custom_call.1} parent=15 // pred_check_branch
          %102 = sbr.rel (%p100) target = $region20
        $region19: #{tpu_custom_call.1} parent=15 // pred_region
          %s103 = sand.u32 %s37, 1
          %s104 = scalar_lea.sflag [#allocation3], %s103
          %s105 = sand.u32 %s37, 1
          %s106 = smul.addr %s105, 8
          %s107 = scalar_lea.vmem [#allocation2], %s106
          %s108 = smul.u32 2, %s21
          %s110 = ssub.s32 128, 128
          %111 = vsyncadd %s104, %s110
          %s112 = smul.addr %s20, 2
          %s113 = sadd.s32 %s108, %s112
          %s114 = smul.addr %s113, 64
          %s115 = scalar_lea.hbm %s0, %s114
          %s117 = sshll.u32 %s107, 4
          %s118 = int_to_ptr.vmem [resolvable:$true] %s117
          %120 = dma.hbm_to_vmem [thread:$0]  %s115, 128, %s118, %s104
        $region20: #{tpu_custom_call.1} parent=15 // pred_fallthru
          _
      $region16: #{tpu_custom_call.1} parent=5 // pred_fallthru
        _
      %p121 = scmp.le.s32.totalorder 1, %s13
      %p122 = scmp.lt.s32.totalorder %s13, 3
      %p123 = pnand %p121, %p122
      %p124 = pneg %p123
      // Predicated region
      $region21: #{tpu_custom_call.1} parent=5 // pred_check
        _
      $region22: #{tpu_custom_call.1} parent=5 // pred_check_branch
        %126 = sbr.rel (%p123) target = $region24
      $region23: #{tpu_custom_call.1} parent=5 // pred_region
        %s127 = ssub.s32 %s13, 1
        %s128 = sand.u32 %s40, 1
        %s129 = scalar_lea.sflag [#allocation3], %s128
        %s130 = sand.u32 %s40, 1
        %s131 = smul.addr %s130, 8
        %s132 = scalar_lea.vmem [#allocation2], %s131
        // Predicated region
        $region25: #{tpu_custom_call.1} parent=23 // pred_check
          %p133 = pneg %p53
        $region26: #{tpu_custom_call.1} parent=23 // pred_check_branch
          %135 = sbr.rel (%p133) target = $region28
        $region27: #{tpu_custom_call.1} parent=23 // pred_region
          %136 = dma.done %s129, 128
        $region28: #{tpu_custom_call.1} parent=23 // pred_fallthru
          _
        %s137 = sand.u32 %s40, 1
        %s138 = scalar_lea.sflag [#allocation3], %s137
        %s139 = sand.u32 %s40, 1
        %s140 = smul.addr %s139, 8
        %s141 = scalar_lea.vmem [#allocation2], %s140
        %p142 = pneg %p53
        %p143 = pneg %p50
        %p144 = pneg %p81
        %p145 = pneg %p78
        %s146 = sand.u32 %s68, 1
        %s147 = scalar_lea.sflag [#allocation4], %s146
        %s148 = sand.u32 %s68, 1
        %s149 = smul.addr %s148, 8
        %s150 = scalar_lea.vmem [#allocation5], %s149
        %s151 = smul.u32 2, %s23
        %s152 = smul.u32 2, %s23
        %v153 = vld [vmem:[%s132] sm:$0xff]
        %v154 = vmul.f32 %v153, %v153
        %v156 = vcombine.high %v154, %v154
        %vm158 = vcmask 1043456
        %v159 = vsel %vm158, %v154, 0.0
        %v160 = vrot.slane %v159, 4
        %v161 = vadd.f32 %v159, %v160
        %v162 = vrot.slane %v161, 2
        %v163 = vadd.f32 %v161, %v162
        %v164 = vrot.slane %v163, 1
        %v165 = vadd.f32 %v163, %v164
        %v166 = vsel %vm158, %v156, 0.0
        %v167 = vrot.slane %v166, 4
        %v168 = vadd.f32 %v166, %v167
        %v169 = vrot.slane %v168, 2
        %v170 = vadd.f32 %v168, %v169
        %v171 = vrot.slane %v170, 1
        %v172 = vadd.f32 %v170, %v171
        %v173 = vrsqrt.pop %v165
        %v174 = vmul.f32 %v165, %v173
        %vm175 = vcmp.eq.f32.partialorder %v165, inf
        %v176 = vsel %vm175, %v165, %v174
        %vm177 = vcmp.eq.f32.partialorder %v165, 0.0
        %v178 = vand.u32 %v165, 2147483648
        %v179 = vsel %vm177, %v178, %v176
        %v180 = vrsqrt.pop %v172
        %v181 = vmul.f32 %v172, %v180
        %vm182 = vcmp.eq.f32.partialorder %v172, inf
        %v183 = vsel %vm182, %v172, %v181
        %vm184 = vcmp.eq.f32.partialorder %v172, 0.0
        %v185 = vand.u32 %v172, 2147483648
        %v186 = vsel %vm184, %v185, %v183
        %v187 = vadd.f32 %v179, 1e-06
        %v188 = vadd.f32 %v186, 1e-06
        %v189 = vrcp.pop %v187
        %v190 = vrcp.pop %v188
        %v193 = vcombine.low %v189, %v190
        %v195 = vmul.f32 %v153, %v193
        %196 = vst [vmem:[%s150] sm:$0xff] %v195
        %s197 = sand.u32 %s68, 1
        %s198 = scalar_lea.sflag [#allocation4], %s197
        %s199 = sand.u32 %s68, 1
        %s200 = smul.addr %s199, 8
        %s201 = scalar_lea.vmem [#allocation5], %s200
        // Predicated region
        $region29: #{tpu_custom_call.1} parent=23 // pred_check
          %p202 = pneg %p78
        $region30: #{tpu_custom_call.1} parent=23 // pred_check_branch
          %204 = sbr.rel (%p202) target = $region32
        $region31: #{tpu_custom_call.1} parent=23 // pred_region
          %s205 = smul.u32 2, %s23
          %s207 = ssub.s32 128, 128
          %208 = vsyncadd %s198, %s207
          %s209 = smul.addr %s22, 2
          %s210 = sadd.s32 %s205, %s209
          %s211 = smul.addr %s210, 64
          %s212 = scalar_lea.hbm %s1, %s211
          %s214 = sshll.u32 %s201, 4
          %s215 = int_to_ptr.vmem [resolvable:$true] %s214
          %217 = dma.vmem_to_hbm [thread:$0]  %s215, 128, %s212, %s198
        $region32: #{tpu_custom_call.1} parent=23 // pred_fallthru
          _
      $region24: #{tpu_custom_call.1} parent=5 // pred_fallthru
        _
      %p218 = scmp.le.s32.totalorder 2, %s13
      // Predicated region
      $region33: #{tpu_custom_call.1} parent=5 // pred_check
        %p219 = pneg %p218
      $region34: #{tpu_custom_call.1} parent=5 // pred_check_branch
        %221 = sbr.rel (%p219) target = $region36
      $region35: #{tpu_custom_call.1} parent=5 // pred_region
        %s222 = ssub.s32 %s13, 2
        // Predicated region
        $region37: #{tpu_custom_call.1} parent=35 // pred_check
          %p223 = pneg %p84
        $region38: #{tpu_custom_call.1} parent=35 // pred_check_branch
          %225 = sbr.rel (%p223) target = $region40
        $region39: #{tpu_custom_call.1} parent=35 // pred_region
          %s226 = sand.u32 %s69, 1
          %s227 = scalar_lea.sflag [#allocation4], %s226
          %s228 = sand.u32 %s69, 1
          %s229 = smul.addr %s228, 8
          %s230 = scalar_lea.vmem [#allocation5], %s229
          %231 = dma.done %s227, 128
        $region40: #{tpu_custom_call.1} parent=35 // pred_fallthru
          _
      $region36: #{tpu_custom_call.1} parent=5 // pred_fallthru
        _
    $region6: #{tpu_custom_call.1} parent=1 // loop_footer
      %s17 = sadd.s32 1, %s13
    $region7: #{tpu_custom_call.1} parent=1 // loop_footer_branch
      %12 = sbr.rel target = $region3
    $region8: #{tpu_custom_call.1} parent=1 // loop_exit
      _
    %232 = vsyncpa [#allocation3], 1
    %s233 = scalar_lea.sflag [#allocation3], 1
    %234 = vsyncpa %s233, 1
    %235 = vsyncpa [#allocation4], 1
    %s236 = scalar_lea.sflag [#allocation4], 1
    %237 = vsyncpa %s236, 1

</llo_original>
